<compile_context>
chip_gen: v5e
topology: v5e:2x2
jax: 0.10.0
libtpu: 0.0.40
codegen_flags: <defaults>
</compile_context>

<pallas_src>
import functools

import jax
import jax.numpy as jnp
from jax.experimental import pallas as pl
from jax.experimental.pallas import tpu as pltpu


def _round_up(n, m):
    return ((n + m - 1) // m) * m


def _mlp_kernel(x_ref, w1_ref, b1_ref, w2_ref, b2_ref, w3_ref, b3_ref, o_ref):
    # Hoist bias reads: one (1,N) load + one broadcast per layer.
    b1 = b1_ref[...]
    b2 = b2_ref[...]
    b3 = b3_ref[...]

    # Layer 1: bf16 MXU matmul, f32 accumulation; bias + ReLU in f32.
    h1 = jnp.dot(x_ref[...], w1_ref[...], preferred_element_type=jnp.float32)
    h1 = jnp.maximum(h1 + b1, 0.0)

    # Layer 2
    h2 = jnp.dot(h1.astype(w2_ref.dtype), w2_ref[...],
                 preferred_element_type=jnp.float32)
    h2 = jnp.maximum(h2 + b2, 0.0)

    # Layer 3 (no activation); output columns are lane-padded to >=128.
    out = jnp.dot(h2.astype(w3_ref.dtype), w3_ref[...],
                  preferred_element_type=jnp.float32)
    o_ref[...] = (out + b3).astype(o_ref.dtype)


@functools.partial(jax.jit, static_argnames=("block_b",))
def generator_forward(x, params, block_b=512):
    """Fused 3-layer MLP forward pass.

    x: (B, input_dim) float32
    params: dict with w1 (in,128), b1 (1,128), w2 (128,256), b2 (1,256),
            w3 (256,out), b3 (1,out)  -- all float32.
    block_b: batch tile size (multiple of 128 recommended; clamped to B).
    """
    w1, b1 = params["w1"], params["b1"]
    w2, b2 = params["w2"], params["b2"]
    w3, b3 = params["w3"], params["b3"]

    B, in_dim = x.shape
    out_dim = w3.shape[1]
    h1_dim, h2_dim = w1.shape[1], w2.shape[1]

    # bf16 operands for the MXU; accumulation stays f32 inside the kernel.
    xc = x.astype(jnp.bfloat16)
    w1c = w1.astype(jnp.bfloat16)
    w2c = w2.astype(jnp.bfloat16)
    w3c = w3.astype(jnp.bfloat16)

    # Lane-dense output: pad final layer to a multiple of 128 columns so the
    # kernel issues full-lane (unmasked) stores; slice back after the call.
    n_pad = _round_up(out_dim, 128)
    if n_pad != out_dim:
        w3c = jnp.pad(w3c, ((0, 0), (0, n_pad - out_dim)))
        b3p = jnp.pad(b3, ((0, 0), (0, n_pad - out_dim)))
    else:
        b3p = b3

    # Batch tile: big enough to amortize ~0.35us/step grid overhead and fill
    # MXU rows, but never larger than the batch (full-array block otherwise).
    block = min(block_b, B)
    grid = (pl.cdiv(B, block),)

    out_padded = pl.pallas_call(
        _mlp_kernel,
        out_shape=jax.ShapeDtypeStruct((B, n_pad), jnp.float32),
        grid_spec=pltpu.PrefetchScalarGridSpec(
            num_scalar_prefetch=0,
            grid=grid,
            in_specs=[
                pl.BlockSpec((block, in_dim),   lambda i: (i, 0)),  # x tile (streamed)
                pl.BlockSpec((in_dim, h1_dim),  lambda i: (0, 0)),  # w1 (resident)
                pl.BlockSpec((1, h1_dim),       lambda i: (0, 0)),  # b1
                pl.BlockSpec((h1_dim, h2_dim),  lambda i: (0, 0)),  # w2
                pl.BlockSpec((1, h2_dim),       lambda i: (0, 0)),  # b2
                pl.BlockSpec((h2_dim, n_pad),   lambda i: (0, 0)),  # w3 (lane-padded)
                pl.BlockSpec((1, n_pad),        lambda i: (0, 0)),  # b3 (lane-padded)
            ],
            out_specs=pl.BlockSpec((block, n_pad), lambda i: (i, 0)),
        ),
        compiler_params=pltpu.CompilerParams(
            dimension_semantics=("parallel",),
        ),
    )(xc, w1c, b1, w2c, b2, w3c, b3p)

    return out_padded[:, :out_dim]


def init_generator_params(key, input_dim, output_dim):
    """Deterministic init mirroring PyTorch nn.Linear default:
    U(-1/sqrt(fan_in), 1/sqrt(fan_in)) for both weights and biases."""
    dims = [(input_dim, 128), (128, 256), (256, output_dim)]
    params = {}
    for idx, (fan_in, fan_out) in enumerate(dims, start=1):
        key, kw, kb = jax.random.split(key, 3)
        bound = 1.0 / jnp.sqrt(jnp.float32(fan_in))
        params[f"w{idx}"] = jax.random.uniform(
            kw, (fan_in, fan_out), jnp.float32, minval=-bound, maxval=bound)
        params[f"b{idx}"] = jax.random.uniform(
            kb, (1, fan_out), jnp.float32, minval=-bound, maxval=bound)
    return params


def generator_reference(x, params):
    """Pure-JAX f32 reference for correctness checking."""
    h = jnp.maximum(x @ params["w1"] + params["b1"], 0.0)
    h = jnp.maximum(h @ params["w2"] + params["b2"], 0.0)
    return h @ params["w3"] + params["b3"]


if __name__ == "__main__":
    key = jax.random.PRNGKey(0)
    key, kx = jax.random.split(key)

    batch = 8
    input_dim = 32     # latent noise dim
    output_dim = 64    # generated sample dim

    params = init_generator_params(key, input_dim, output_dim)
    x = jax.random.normal(kx, (batch, input_dim), jnp.float32)

    out = generator_forward(x, params)
    out = jax.block_until_ready(out)

    ref = generator_reference(x, params)
    assert out.shape == (batch, output_dim), out.shape
    # bf16 MXU operands with f32 accumulation: loose-but-meaningful tolerance
    # against the pure-f32 reference.
    assert jnp.allclose(out, ref, atol=5e-2, rtol=5e-2), "mismatch vs reference"

    print("KERNEL_OK")
</pallas_src>

<mosaic_0001>
module attributes {stable_mosaic.version = 11 : i64} {
  func.func @_mlp_kernel(%arg0: i32, %arg1: memref<8x32xbf16, #tpu.memory_space<vmem>>, %arg2: memref<32x128xbf16, #tpu.memory_space<vmem>>, %arg3: memref<1x128xf32, #tpu.memory_space<vmem>>, %arg4: memref<128x256xbf16, #tpu.memory_space<vmem>>, %arg5: memref<1x256xf32, #tpu.memory_space<vmem>>, %arg6: memref<256x128xbf16, #tpu.memory_space<vmem>>, %arg7: memref<1x128xf32, #tpu.memory_space<vmem>>, %arg8: memref<8x128xf32, #tpu.memory_space<vmem>>) attributes {dimension_semantics = [#tpu.dimension_semantics<parallel>], iteration_bounds = array<i64: 1>, scalar_prefetch = 0 : i64, scratch_operands = 0 : i64, tpu.core_type = #tpu.core_type<tc>, window_params = [{transform_indices = @transform_0, window_bounds = array<i64: 8, 32>}, {pipeline_mode = #tpu.pipeline_mode<synchronous>, transform_indices = @transform_1, window_bounds = array<i64: 32, 128>}, {pipeline_mode = #tpu.pipeline_mode<synchronous>, transform_indices = @transform_2, window_bounds = array<i64: 1, 128>}, {pipeline_mode = #tpu.pipeline_mode<synchronous>, transform_indices = @transform_3, window_bounds = array<i64: 128, 256>}, {pipeline_mode = #tpu.pipeline_mode<synchronous>, transform_indices = @transform_4, window_bounds = array<i64: 1, 256>}, {pipeline_mode = #tpu.pipeline_mode<synchronous>, transform_indices = @transform_5, window_bounds = array<i64: 256, 128>}, {pipeline_mode = #tpu.pipeline_mode<synchronous>, transform_indices = @transform_6, window_bounds = array<i64: 1, 128>}, {transform_indices = @transform_7, window_bounds = array<i64: 8, 128>}]} {
    %c0 = arith.constant 0 : index
    %c0_0 = arith.constant 0 : index
    %0 = vector.load %arg3[%c0, %c0_0] : memref<1x128xf32, #tpu.memory_space<vmem>>, vector<1x128xf32>
    %c0_1 = arith.constant 0 : index
    %c0_2 = arith.constant 0 : index
    %1 = vector.load %arg5[%c0_1, %c0_2] : memref<1x256xf32, #tpu.memory_space<vmem>>, vector<1x256xf32>
    %c0_3 = arith.constant 0 : index
    %c0_4 = arith.constant 0 : index
    %2 = vector.load %arg7[%c0_3, %c0_4] : memref<1x128xf32, #tpu.memory_space<vmem>>, vector<1x128xf32>
    %c0_5 = arith.constant 0 : index
    %c0_6 = arith.constant 0 : index
    %3 = vector.load %arg1[%c0_5, %c0_6] : memref<8x32xbf16, #tpu.memory_space<vmem>>, vector<8x32xbf16>
    %c0_7 = arith.constant 0 : index
    %c0_8 = arith.constant 0 : index
    %4 = vector.load %arg2[%c0_7, %c0_8] : memref<32x128xbf16, #tpu.memory_space<vmem>>, vector<32x128xbf16>
    %cst = arith.constant dense<0.000000e+00> : vector<8x128xf32>
    %5 = tpu.matmul %3, %4, %cst {dimension_numbers = #tpu.dot_dimension_numbers<[1], [0], [0], [1], [0, 0, 1, 1], [], []>} : vector<8x32xbf16>, vector<32x128xbf16>, vector<8x128xf32> -> vector<8x128xf32>
    %6 = vector.broadcast %0 : vector<1x128xf32> to vector<8x128xf32>
    %7 = arith.addf %5, %6 : vector<8x128xf32>
    %cst_9 = arith.constant 0.000000e+00 : f32
    %8 = vector.broadcast %cst_9 : f32 to vector<8x128xf32>
    %9 = arith.maximumf %7, %8 : vector<8x128xf32>
    %10 = arith.truncf %9 : vector<8x128xf32> to vector<8x128xbf16>
    %c0_10 = arith.constant 0 : index
    %c0_11 = arith.constant 0 : index
    %11 = vector.load %arg4[%c0_10, %c0_11] : memref<128x256xbf16, #tpu.memory_space<vmem>>, vector<128x256xbf16>
    %cst_12 = arith.constant dense<0.000000e+00> : vector<8x256xf32>
    %12 = tpu.matmul %10, %11, %cst_12 {dimension_numbers = #tpu.dot_dimension_numbers<[1], [0], [0], [1], [0, 0, 1, 1], [], []>} : vector<8x128xbf16>, vector<128x256xbf16>, vector<8x256xf32> -> vector<8x256xf32>
    %13 = vector.broadcast %1 : vector<1x256xf32> to vector<8x256xf32>
    %14 = arith.addf %12, %13 : vector<8x256xf32>
    %cst_13 = arith.constant 0.000000e+00 : f32
    %15 = vector.broadcast %cst_13 : f32 to vector<8x256xf32>
    %16 = arith.maximumf %14, %15 : vector<8x256xf32>
    %17 = arith.truncf %16 : vector<8x256xf32> to vector<8x256xbf16>
    %c0_14 = arith.constant 0 : index
    %c0_15 = arith.constant 0 : index
    %18 = vector.load %arg6[%c0_14, %c0_15] : memref<256x128xbf16, #tpu.memory_space<vmem>>, vector<256x128xbf16>
    %cst_16 = arith.constant dense<0.000000e+00> : vector<8x128xf32>
    %19 = tpu.matmul %17, %18, %cst_16 {dimension_numbers = #tpu.dot_dimension_numbers<[1], [0], [0], [1], [0, 0, 1, 1], [], []>} : vector<8x256xbf16>, vector<256x128xbf16>, vector<8x128xf32> -> vector<8x128xf32>
    %20 = vector.broadcast %2 : vector<1x128xf32> to vector<8x128xf32>
    %21 = arith.addf %19, %20 : vector<8x128xf32>
    %c0_17 = arith.constant 0 : index
    %c0_18 = arith.constant 0 : index
    %22 = vector.load %arg8[%c0_17, %c0_18] : memref<8x128xf32, #tpu.memory_space<vmem>>, vector<8x128xf32>
    tpu.vector_store %arg8[%c0_17, %c0_18], %21 {strides = array<i32>} : memref<8x128xf32, #tpu.memory_space<vmem>>, vector<8x128xf32>,
    return
  }
  func.func @transform_0(%arg0: i32) -> (i32, i32) {
    %c0_i32 = arith.constant 0 : i32
    %c0_i32_0 = arith.constant 0 : i32
    return %arg0, %c0_i32 : i32, i32
  }
  func.func @transform_1(%arg0: i32) -> (i32, i32) {
    %c0_i32 = arith.constant 0 : i32
    %c0_i32_0 = arith.constant 0 : i32
    %c0_i32_1 = arith.constant 0 : i32
    return %c0_i32, %c0_i32_0 : i32, i32
  }
  func.func @transform_2(%arg0: i32) -> (i32, i32) {
    %c0_i32 = arith.constant 0 : i32
    %c0_i32_0 = arith.constant 0 : i32
    %c0_i32_1 = arith.constant 0 : i32
    return %c0_i32, %c0_i32_0 : i32, i32
  }
  func.func @transform_3(%arg0: i32) -> (i32, i32) {
    %c0_i32 = arith.constant 0 : i32
    %c0_i32_0 = arith.constant 0 : i32
    %c0_i32_1 = arith.constant 0 : i32
    return %c0_i32, %c0_i32_0 : i32, i32
  }
  func.func @transform_4(%arg0: i32) -> (i32, i32) {
    %c0_i32 = arith.constant 0 : i32
    %c0_i32_0 = arith.constant 0 : i32
    %c0_i32_1 = arith.constant 0 : i32
    return %c0_i32, %c0_i32_0 : i32, i32
  }
  func.func @transform_5(%arg0: i32) -> (i32, i32) {
    %c0_i32 = arith.constant 0 : i32
    %c0_i32_0 = arith.constant 0 : i32
    %c0_i32_1 = arith.constant 0 : i32
    return %c0_i32, %c0_i32_0 : i32, i32
  }
  func.func @transform_6(%arg0: i32) -> (i32, i32) {
    %c0_i32 = arith.constant 0 : i32
    %c0_i32_0 = arith.constant 0 : i32
    %c0_i32_1 = arith.constant 0 : i32
    return %c0_i32, %c0_i32_0 : i32, i32
  }
  func.func @transform_7(%arg0: i32) -> (i32, i32) {
    %c0_i32 = arith.constant 0 : i32
    %c0_i32_0 = arith.constant 0 : i32
    return %arg0, %c0_i32 : i32, i32
  }
}

</mosaic_0001>

<llo_original>
// kernel: generator_forward.1
$region0: #{generator_forward.1}
  #allocation0 [shape = 'u32[]', space=smem, size = 0x4, offset = 0x4, fixed_abs, tag = 'smem constant byte address 0x4 - core index']
  #allocation1 [shape = 'u32[72,128]{1,0:T(1,128)}', space=vmem, size = 0x9000, scoped, tag = 'internal scratch']
  %s0 = inlined_call_operand.vmem [shape: bf16[8,32], index: 0, kind: input, shape index: {}]
  %s1 = inlined_call_operand.vmem [shape: bf16[32,128], index: 1, kind: input, shape index: {}]
  %s2 = inlined_call_operand.vmem [shape: f32[1,128], index: 2, kind: input, shape index: {}]
  %s3 = inlined_call_operand.vmem [shape: bf16[128,256], index: 3, kind: input, shape index: {}]
  %s4 = inlined_call_operand.vmem [shape: f32[1,256], index: 4, kind: input, shape index: {}]
  %s5 = inlined_call_operand.vmem [shape: bf16[256,128], index: 5, kind: input, shape index: {}]
  %s6 = inlined_call_operand.vmem [shape: f32[1,128], index: 6, kind: input, shape index: {}]
  %s7 = inlined_call_operand.hbm [shape: f32[8,128], index: 7, kind: output, shape index: {}]
  %s8 = sld [smem:[#allocation0]]
  $region38: #{generator_forward.1} parent=0
    _
  %s10 = ssub.s32 1, %s8
  %s11 = scalar_select 0, %s10, %s8
  $region1: #{generator_forward.1} parent=0
    #allocation2 [shape = 'u8[4096]{0}', space=vmem, size = 0x1000, scoped, tag = 'output window, operand 0, single buffered']
    #allocation3 [shape = 's32[1]{0}', space=sflag, size = 0x4, scoped, tag = 'scoped memory for generator_forward.1']
    %12 = vsyncpa [#allocation3], 0
    // Predicated region
    $region2: #{generator_forward.1} parent=1 // pred_check
      _
    $region3: #{generator_forward.1} parent=1 // pred_check_branch
      %14 = sbr.rel (0) target = $region5
    $region4: #{generator_forward.1} parent=1 // pred_region
      _
    $region5: #{generator_forward.1} parent=1 // pred_fallthru
      _
    // Predicated region
    $region6: #{generator_forward.1} parent=1 // pred_check
      _
    $region7: #{generator_forward.1} parent=1 // pred_check_branch
      %16 = sbr.rel (0) target = $region9
    $region8: #{generator_forward.1} parent=1 // pred_region
      _
    $region9: #{generator_forward.1} parent=1 // pred_fallthru
      _
    // Predicated region
    $region10: #{generator_forward.1} parent=1 // pred_check
      _
    $region11: #{generator_forward.1} parent=1 // pred_check_branch
      %18 = sbr.rel (0) target = $region13
    $region12: #{generator_forward.1} parent=1 // pred_region
      _
    $region13: #{generator_forward.1} parent=1 // pred_fallthru
      _
    // Predicated region
    $region14: #{generator_forward.1} parent=1 // pred_check
      _
    $region15: #{generator_forward.1} parent=1 // pred_check_branch
      %20 = sbr.rel (0) target = $region17
    $region16: #{generator_forward.1} parent=1 // pred_region
      _
    $region17: #{generator_forward.1} parent=1 // pred_fallthru
      _
    // Predicated region
    $region18: #{generator_forward.1} parent=1 // pred_check
      _
    $region19: #{generator_forward.1} parent=1 // pred_check_branch
      %22 = sbr.rel (0) target = $region21
    $region20: #{generator_forward.1} parent=1 // pred_region
      _
    $region21: #{generator_forward.1} parent=1 // pred_fallthru
      _
    // Predicated region
    $region22: #{generator_forward.1} parent=1 // pred_check
      _
    $region23: #{generator_forward.1} parent=1 // pred_check_branch
      %24 = sbr.rel (0) target = $region25
    $region24: #{generator_forward.1} parent=1 // pred_region
      _
    $region25: #{generator_forward.1} parent=1 // pred_fallthru
      _
    // Predicated region
    $region26: #{generator_forward.1} parent=1 // pred_check
      _
    $region27: #{generator_forward.1} parent=1 // pred_check_branch
      %26 = sbr.rel (0) target = $region29
    $region28: #{generator_forward.1} parent=1 // pred_region
      _
    $region29: #{generator_forward.1} parent=1 // pred_fallthru
      _
    %v28 = vld [vmem:[%s2] sm:$0x1]
    %v29 = vld [vmem:[%s4] sm:$0x3]
    %v30 = vld [vmem:[%s6] sm:$0x1]
    %v31 = vld [vmem:[%s0] sm:$0xf]
    %v32 = vld [vmem:[%s1] sm:$0xf]
    %v33 = vld [vmem:[%s1 + $0x4] sm:$0xf]
    %v34 = vld [vmem:[%s1 + $0x8] sm:$0xf]
    %v35 = vld [vmem:[%s1 + $0xc] sm:$0xf]
    %v37 = vperm.slane %v28, 0
    %v43 = vunpack.c.l.b16 %v32
    %v44 = vunpack.c.l.b16 %v33
    %v45 = vunpack.c.l.b16 %v34
    %v46 = vunpack.c.l.b16 %v35
    %v47 = vpack.c.b16 %v44, %v43
    %v48 = vpack.c.b16 %v46, %v45
    %vm51 = vcmask 261120
    %v53 = vsel %vm51, %v31, 0
    %55 = vmatpush.bf16.msra.mxu0 0
    %56 = vmatpush.bf16.msra.mxu0 0
    %57 = vmatpush.bf16.msra.mxu0 0
    %58 = vmatpush.bf16.msra.mxu0 0
    %59 = vmatpush.bf16.msra.mxu0 0
    %60 = vmatpush.bf16.msra.mxu0 0
    %61 = vmatpush.bf16.msra.mxu0 %v48
    %62 = vmatpush.bf16.msra.mxu0 %v47
    %63 = vmatmul.bf16.gmra.mxu0 %v53
    %v64 = vpop.f32.mrf.mxu0
    %v65 = vadd.f32 %v37, %v64
    %v66 = vpop.f32.mrf.mxu0
    %67 = vdwg.mxu0
    %v68 = vmax.f32 %v65, 0.0
    %v69 = vpack.c.bf16 %v68, %v68
    %v70 = vld [vmem:[%s3] sm:$0xff]
    %v71 = vld [vmem:[%s3 + $0x8] sm:$0xff]
    %v72 = vld [vmem:[%s3 + $0x10] sm:$0xff]
    %v73 = vld [vmem:[%s3 + $0x18] sm:$0xff]
    %v74 = vld [vmem:[%s3 + $0x20] sm:$0xff]
    %v75 = vld [vmem:[%s3 + $0x28] sm:$0xff]
    %v76 = vld [vmem:[%s3 + $0x30] sm:$0xff]
    %v77 = vld [vmem:[%s3 + $0x38] sm:$0xff]
    %v78 = vld [vmem:[%s3 + $0x40] sm:$0xff]
    %v79 = vld [vmem:[%s3 + $0x48] sm:$0xff]
    %v80 = vld [vmem:[%s3 + $0x50] sm:$0xff]
    %v81 = vld [vmem:[%s3 + $0x58] sm:$0xff]
    %v82 = vld [vmem:[%s3 + $0x60] sm:$0xff]
    %v83 = vld [vmem:[%s3 + $0x68] sm:$0xff]
    %v84 = vld [vmem:[%s3 + $0x70] sm:$0xff]
    %v85 = vld [vmem:[%s3 + $0x78] sm:$0xff]
    %v87 = vperm.slane %v29, 0
    %v88 = vperm.slane %v29, 1
    %v107 = vunpack.c.l.b16 %v70
    %v108 = vunpack.c.h.b16 %v70
    %v109 = vunpack.c.l.b16 %v71
    %v110 = vunpack.c.h.b16 %v71
    %v111 = vunpack.c.l.b16 %v72
    %v112 = vunpack.c.h.b16 %v72
    %v113 = vunpack.c.l.b16 %v73
    %v114 = vunpack.c.h.b16 %v73
    %v115 = vunpack.c.l.b16 %v74
    %v116 = vunpack.c.h.b16 %v74
    %v117 = vunpack.c.l.b16 %v75
    %v118 = vunpack.c.h.b16 %v75
    %v119 = vunpack.c.l.b16 %v76
    %v120 = vunpack.c.h.b16 %v76
    %v121 = vunpack.c.l.b16 %v77
    %v122 = vunpack.c.h.b16 %v77
    %v123 = vunpack.c.l.b16 %v78
    %v124 = vunpack.c.h.b16 %v78
    %v125 = vunpack.c.l.b16 %v79
    %v126 = vunpack.c.h.b16 %v79
    %v127 = vunpack.c.l.b16 %v80
    %v128 = vunpack.c.h.b16 %v80
    %v129 = vunpack.c.l.b16 %v81
    %v130 = vunpack.c.h.b16 %v81
    %v131 = vunpack.c.l.b16 %v82
    %v132 = vunpack.c.h.b16 %v82
    %v133 = vunpack.c.l.b16 %v83
    %v134 = vunpack.c.h.b16 %v83
    %v135 = vunpack.c.l.b16 %v84
    %v136 = vunpack.c.h.b16 %v84
    %v137 = vunpack.c.l.b16 %v85
    %v138 = vunpack.c.h.b16 %v85
    %v139 = vpack.c.b16 %v109, %v107
    %v140 = vpack.c.b16 %v110, %v108
    %v141 = vpack.c.b16 %v113, %v111
    %v142 = vpack.c.b16 %v114, %v112
    %v143 = vpack.c.b16 %v117, %v115
    %v144 = vpack.c.b16 %v118, %v116
    %v145 = vpack.c.b16 %v121, %v119
    %v146 = vpack.c.b16 %v122, %v120
    %v147 = vpack.c.b16 %v125, %v123
    %v148 = vpack.c.b16 %v126, %v124
    %v149 = vpack.c.b16 %v129, %v127
    %v150 = vpack.c.b16 %v130, %v128
    %v151 = vpack.c.b16 %v133, %v131
    %v152 = vpack.c.b16 %v134, %v132
    %v153 = vpack.c.b16 %v137, %v135
    %v154 = vpack.c.b16 %v138, %v136
    %171 = vmatpush.bf16.msra.mxu0 %v153
    %172 = vmatpush.bf16.msra.mxu0 %v151
    %173 = vmatpush.bf16.msra.mxu0 %v149
    %174 = vmatpush.bf16.msra.mxu0 %v147
    %175 = vmatpush.bf16.msra.mxu0 %v145
    %176 = vmatpush.bf16.msra.mxu0 %v143
    %177 = vmatpush.bf16.msra.mxu0 %v141
    %178 = vmatpush.bf16.msra.mxu0 %v139
    %179 = vmatmul.bf16.gmra.mxu0 %v69
    %v180 = vpop.f32.mrf.mxu0
    %v181 = vadd.f32 %v87, %v180
    %v182 = vpop.f32.mrf.mxu0
    %183 = vdwg.mxu0
    %184 = vmatpush.bf16.msra.mxu0 %v154
    %185 = vmatpush.bf16.msra.mxu0 %v152
    %186 = vmatpush.bf16.msra.mxu0 %v150
    %187 = vmatpush.bf16.msra.mxu0 %v148
    %188 = vmatpush.bf16.msra.mxu0 %v146
    %189 = vmatpush.bf16.msra.mxu0 %v144
    %190 = vmatpush.bf16.msra.mxu0 %v142
    %191 = vmatpush.bf16.msra.mxu0 %v140
    %192 = vmatmul.bf16.gmra.mxu0 %v69
    %v193 = vpop.f32.mrf.mxu0
    %v194 = vadd.f32 %v88, %v193
    %v195 = vpop.f32.mrf.mxu0
    %196 = vdwg.mxu0
    %v197 = vmax.f32 %v181, 0.0
    %v198 = vmax.f32 %v194, 0.0
    %v199 = vpack.c.bf16 %v197, %v197
    %v200 = vpack.c.bf16 %v198, %v198
    %v201 = vld [vmem:[%s5] sm:$0xf]
    %v202 = vld [vmem:[%s5 + $0x4] sm:$0xf]
    %v203 = vld [vmem:[%s5 + $0x8] sm:$0xf]
    %v204 = vld [vmem:[%s5 + $0xc] sm:$0xf]
    %v205 = vld [vmem:[%s5 + $0x10] sm:$0xf]
    %v206 = vld [vmem:[%s5 + $0x14] sm:$0xf]
    %v207 = vld [vmem:[%s5 + $0x18] sm:$0xf]
    %v208 = vld [vmem:[%s5 + $0x1c] sm:$0xf]
    %v209 = vld [vmem:[%s5 + $0x20] sm:$0xf]
    %v210 = vld [vmem:[%s5 + $0x24] sm:$0xf]
    %v211 = vld [vmem:[%s5 + $0x28] sm:$0xf]
    %v212 = vld [vmem:[%s5 + $0x2c] sm:$0xf]
    %v213 = vld [vmem:[%s5 + $0x30] sm:$0xf]
    %v214 = vld [vmem:[%s5 + $0x34] sm:$0xf]
    %v215 = vld [vmem:[%s5 + $0x38] sm:$0xf]
    %v216 = vld [vmem:[%s5 + $0x3c] sm:$0xf]
    %v217 = vld [vmem:[%s5 + $0x40] sm:$0xf]
    %v218 = vld [vmem:[%s5 + $0x44] sm:$0xf]
    %v219 = vld [vmem:[%s5 + $0x48] sm:$0xf]
    %v220 = vld [vmem:[%s5 + $0x4c] sm:$0xf]
    %v221 = vld [vmem:[%s5 + $0x50] sm:$0xf]
    %v222 = vld [vmem:[%s5 + $0x54] sm:$0xf]
    %v223 = vld [vmem:[%s5 + $0x58] sm:$0xf]
    %v224 = vld [vmem:[%s5 + $0x5c] sm:$0xf]
    %v225 = vld [vmem:[%s5 + $0x60] sm:$0xf]
    %v226 = vld [vmem:[%s5 + $0x64] sm:$0xf]
    %v227 = vld [vmem:[%s5 + $0x68] sm:$0xf]
    %v228 = vld [vmem:[%s5 + $0x6c] sm:$0xf]
    %v229 = vld [vmem:[%s5 + $0x70] sm:$0xf]
    %v230 = vld [vmem:[%s5 + $0x74] sm:$0xf]
    %v231 = vld [vmem:[%s5 + $0x78] sm:$0xf]
    %v232 = vld [vmem:[%s5 + $0x7c] sm:$0xf]
    %v234 = vperm.slane %v30, 0
    %v268 = vunpack.c.l.b16 %v201
    %v269 = vunpack.c.l.b16 %v202
    %v270 = vunpack.c.l.b16 %v203
    %v271 = vunpack.c.l.b16 %v204
    %v272 = vunpack.c.l.b16 %v205
    %v273 = vunpack.c.l.b16 %v206
    %v274 = vunpack.c.l.b16 %v207
    %v275 = vunpack.c.l.b16 %v208
    %v276 = vunpack.c.l.b16 %v209
    %v277 = vunpack.c.l.b16 %v210
    %v278 = vunpack.c.l.b16 %v211
    %v279 = vunpack.c.l.b16 %v212
    %v280 = vunpack.c.l.b16 %v213
    %v281 = vunpack.c.l.b16 %v214
    %v282 = vunpack.c.l.b16 %v215
    %v283 = vunpack.c.l.b16 %v216
    %v284 = vunpack.c.l.b16 %v217
    %v285 = vunpack.c.l.b16 %v218
    %v286 = vunpack.c.l.b16 %v219
    %v287 = vunpack.c.l.b16 %v220
    %v288 = vunpack.c.l.b16 %v221
    %v289 = vunpack.c.l.b16 %v222
    %v290 = vunpack.c.l.b16 %v223
    %v291 = vunpack.c.l.b16 %v224
    %v292 = vunpack.c.l.b16 %v225
    %v293 = vunpack.c.l.b16 %v226
    %v294 = vunpack.c.l.b16 %v227
    %v295 = vunpack.c.l.b16 %v228
    %v296 = vunpack.c.l.b16 %v229
    %v297 = vunpack.c.l.b16 %v230
    %v298 = vunpack.c.l.b16 %v231
    %v299 = vunpack.c.l.b16 %v232
    %v300 = vpack.c.b16 %v269, %v268
    %v301 = vpack.c.b16 %v271, %v270
    %v302 = vpack.c.b16 %v273, %v272
    %v303 = vpack.c.b16 %v275, %v274
    %v304 = vpack.c.b16 %v277, %v276
    %v305 = vpack.c.b16 %v279, %v278
    %v306 = vpack.c.b16 %v281, %v280
    %v307 = vpack.c.b16 %v283, %v282
    %v308 = vpack.c.b16 %v285, %v284
    %v309 = vpack.c.b16 %v287, %v286
    %v310 = vpack.c.b16 %v289, %v288
    %v311 = vpack.c.b16 %v291, %v290
    %v312 = vpack.c.b16 %v293, %v292
    %v313 = vpack.c.b16 %v295, %v294
    %v314 = vpack.c.b16 %v297, %v296
    %v315 = vpack.c.b16 %v299, %v298
    %332 = vmatpush.bf16.msra.mxu0 %v307
    %333 = vmatpush.bf16.msra.mxu0 %v306
    %334 = vmatpush.bf16.msra.mxu0 %v305
    %335 = vmatpush.bf16.msra.mxu0 %v304
    %336 = vmatpush.bf16.msra.mxu0 %v303
    %337 = vmatpush.bf16.msra.mxu0 %v302
    %338 = vmatpush.bf16.msra.mxu0 %v301
    %339 = vmatpush.bf16.msra.mxu0 %v300
    %340 = vmatmul.bf16.gmra.mxu0 %v199
    %v341 = vpop.f32.mrf.mxu0
    %v342 = vadd.f32 %v234, %v341
    %v343 = vpop.f32.mrf.mxu0
    %344 = vdwg.mxu0
    %345 = vmatpush.bf16.msra.mxu0 %v315
    %346 = vmatpush.bf16.msra.mxu0 %v314
    %347 = vmatpush.bf16.msra.mxu0 %v313
    %348 = vmatpush.bf16.msra.mxu0 %v312
    %349 = vmatpush.bf16.msra.mxu0 %v311
    %350 = vmatpush.bf16.msra.mxu0 %v310
    %351 = vmatpush.bf16.msra.mxu0 %v309
    %352 = vmatpush.bf16.msra.mxu0 %v308
    %353 = vmatmul.bf16.gmra.mxu0 %v200
    %v354 = vpop.f32.mrf.mxu0
    %v355 = vadd.f32 %v342, %v354
    %v356 = vpop.f32.mrf.mxu0
    %357 = vdwg.mxu0
    %358 = vst [vmem:[#allocation2] sm:$0xff] %v355
    // Predicated region
    $region30: #{generator_forward.1} parent=1 // pred_check
      _
    $region31: #{generator_forward.1} parent=1 // pred_check_branch
      %360 = sbr.rel (0) target = $region33
    $region32: #{generator_forward.1} parent=1 // pred_region
      %362 = vsyncadd [#allocation3], 0
      %s364 = sshll.u32 [#allocation2], 4
      %s365 = int_to_ptr.vmem [resolvable:$true] %s364
      %s366 = sshll.u32 %s7, 4
      %s367 = int_to_ptr.hbm [resolvable:$true] %s366
      %369 = dma.vmem_to_hbm [thread:$0]  %s365, 128, %s367, [#allocation3]
    $region33: #{generator_forward.1} parent=1 // pred_fallthru
      _
    // Predicated region
    $region34: #{generator_forward.1} parent=1 // pred_check
      _
    $region35: #{generator_forward.1} parent=1 // pred_check_branch
      %371 = sbr.rel (0) target = $region37
    $region36: #{generator_forward.1} parent=1 // pred_region
      %373 = dma.done [#allocation3], 128
    $region37: #{generator_forward.1} parent=1 // pred_fallthru
      _
    %374 = vsyncpa [#allocation3], 1

</llo_original>
